<compile_context>
chip_gen: v7x
topology: tpu7x:2x2x1
jax: 0.10.0
libtpu: 0.0.40
codegen_flags: <defaults>
</compile_context>

<pallas_src>
import jax
import jax.numpy as jnp
from jax.experimental import pallas as pl
from jax.experimental.pallas import tpu as pltpu


# ----------------------------------------------------------------------------
# Fused two-head classifier kernel (single shot):
#   h = relu( x @ [W1_h1 | W1_h2] + [b1_h1 | b1_h2] )           (M, 2H)  f32
#   y = sigmoid( h @ [[W2_h1, 0], [0, W2_h2]] + [b2_h1|b2_h2] ) (M, 2N)  f32
# ----------------------------------------------------------------------------
def _fused_heads_kernel(x_ref, w1_ref, b1_ref, w2_ref, b2_ref, o_ref):
    # W1 is stored bf16 (halves the dominant HBM->VMEM DMA); cast x to bf16 so
    # the MXU consumes bf16 operands while accumulating in f32.
    x = x_ref[...].astype(jnp.bfloat16)
    h = jnp.dot(x, w1_ref[...], preferred_element_type=jnp.float32)
    h = jnp.maximum(h + b1_ref[...], 0.0)                       # ReLU, f32

    # Block-diagonal W2_both fuses both heads' second layers into one dot:
    #   y[:, :N] = h[:, :H] @ W2_1 ;  y[:, N:] = h[:, H:] @ W2_2
    y = jnp.dot(h, w2_ref[...], preferred_element_type=jnp.float32) + b2_ref[...]
    o_ref[...] = jax.nn.sigmoid(y).astype(o_ref.dtype)


def fused_heads_forward(x_flat, w1_both, b1_both, w2_both, b2_both):
    """x_flat: (M, K) f32.  w1_both: (K, 2H) bf16.  b1/W2/b2: f32.
    Returns (M, 2N) f32."""
    m, k = x_flat.shape
    k_w, h2 = w1_both.shape
    assert k == k_w, "x feature dim must match W1 rows (wrapper pads to K_full)"
    n2 = w2_both.shape[1]

    grid_spec = pltpu.PrefetchScalarGridSpec(
        num_scalar_prefetch=0,
        grid=(1,),                                    # single shot, no reduction grid
        in_specs=[
            pl.BlockSpec((m, k), lambda i: (0, 0)),       # x            (full)
            pl.BlockSpec((k, h2), lambda i: (0, 0)),      # W1_both bf16 (full)
            pl.BlockSpec((1, h2), lambda i: (0, 0)),      # b1_both f32
            pl.BlockSpec((h2, n2), lambda i: (0, 0)),     # W2_both f32 (block-diag)
            pl.BlockSpec((1, n2), lambda i: (0, 0)),      # b2_both f32
        ],
        out_specs=pl.BlockSpec((m, n2), lambda i: (0, 0)),
    )

    return pl.pallas_call(
        _fused_heads_kernel,
        out_shape=jax.ShapeDtypeStruct((m, n2), jnp.float32),
        grid_spec=grid_spec,
        # Single-shot kernel: nothing to megacore-split.  If a real batch/grid
        # axis were added (grid=(B_blocks,)), it should be marked "parallel"
        # to shard across v7x's two TensorCores.
        compiler_params=pltpu.CompilerParams(
            dimension_semantics=("arbitrary",)
        ),
    )(x_flat, w1_both, b1_both, w2_both, b2_both)


# ----------------------------------------------------------------------------
# Classifier2Head (small-shape synthetic configuration)
# ----------------------------------------------------------------------------
class Classifier2HeadPallas:
    def __init__(self, key, *, num_actors=3, max_size=8, input_size=128,
                 hidden_size=128):
        self.num_actors = num_actors
        self.max_size = max_size
        self.input_size = input_size
        self.hidden_size = hidden_size

        K = max_size * input_size
        H = hidden_size
        N = num_actors

        def xavier(key, fan_in, fan_out):
            # torch.nn.init.xavier_uniform_ on a (out, in) weight; stored
            # transposed (in, out) so the kernel does x @ W directly.
            limit = jnp.sqrt(6.0 / (fan_in + fan_out))
            return jax.random.uniform(key, (fan_in, fan_out),
                                      dtype=jnp.float32,
                                      minval=-limit, maxval=limit)

        k1, k2, k3, k4 = jax.random.split(key, 4)
        # f32 master parameters (also used by the pure-JAX reference).
        self.h1_w1 = xavier(k1, K, H)
        self.h1_b1 = jnp.full((1, H), 0.01, jnp.float32)
        self.h1_w2 = xavier(k2, H, N)
        self.h1_b2 = jnp.full((1, N), 0.01, jnp.float32)
        self.h2_w1 = xavier(k3, K, H)
        self.h2_b1 = jnp.full((1, H), 0.01, jnp.float32)
        self.h2_w2 = xavier(k4, H, N)
        self.h2_b2 = jnp.full((1, N), 0.01, jnp.float32)

        # Fused first layer: (K, 2H) stored in bf16 — dominant DMA halved.
        self.w1_both = jnp.concatenate(
            [self.h1_w1, self.h2_w1], axis=1).astype(jnp.bfloat16)          # (K, 2H)
        self.b1_both = jnp.concatenate([self.h1_b1, self.h2_b1], axis=1)    # (1, 2H) f32

        # Fused second layer: block-diagonal (2H, 2N) + concatenated bias,
        # kept in f32 (tiny; preserves epilogue precision).
        z = jnp.zeros((H, N), jnp.float32)
        self.w2_both = jnp.concatenate(
            [jnp.concatenate([self.h1_w2, z], axis=1),
             jnp.concatenate([z, self.h2_w2], axis=1)], axis=0)             # (2H, 2N)
        self.b2_both = jnp.concatenate([self.h1_b2, self.h2_b2], axis=1)    # (1, 2N)

    # -- wrapper helpers ------------------------------------------------------
    def _pad_flatten(self, enc_out):
        """Zero-pad (seq, D) -> (max_size, D) and flatten.  Always uses K_full
        so every pallas_call sees identical static shapes (no per-seq
        recompilation)."""
        seq, d = enc_out.shape
        assert d == self.input_size and seq <= self.max_size
        x = jnp.zeros((self.max_size, self.input_size), jnp.float32)
        x = x.at[:seq].set(enc_out)
        return x.reshape(1, -1)

    def forward(self, enc_out):
        """enc_out: (seq, input_size) f32 — stand-in for encoder output."""
        x_flat = self._pad_flatten(enc_out)
        y = fused_heads_forward(x_flat, self.w1_both, self.b1_both,
                                self.w2_both, self.b2_both)
        n = self.num_actors
        return y[:, :n], y[:, n:]

    def forward_batched(self, enc_out_batch):
        """enc_out_batch: (B, seq, input_size).  One pallas_call for the whole
        batch — W1 is DMA'd once and the MXU M-dimension grows from 1 to B."""
        b, seq, d = enc_out_batch.shape
        assert d == self.input_size and seq <= self.max_size
        x = jnp.zeros((b, self.max_size, self.input_size), jnp.float32)
        x = x.at[:, :seq].set(enc_out_batch)
        x_flat = x.reshape(b, -1)
        y = fused_heads_forward(x_flat, self.w1_both, self.b1_both,
                                self.w2_both, self.b2_both)
        n = self.num_actors
        return y[:, :n], y[:, n:]

    # pure-JAX f32 reference for validation (matches the torch forward: pad,
    # flatten, Linear -> ReLU -> Linear -> sigmoid per head)
    def forward_ref(self, enc_out):
        seq = enc_out.shape[0]
        x = jnp.zeros((self.max_size, self.input_size), jnp.float32)
        x = x.at[:seq].set(enc_out)
        x_flat = x.reshape(1, -1)

        def head(w1, b1, w2, b2):
            h = jnp.maximum(x_flat @ w1 + b1, 0.0)
            return jax.nn.sigmoid(h @ w2 + b2)

        return (head(self.h1_w1, self.h1_b1, self.h1_w2, self.h1_b2),
                head(self.h2_w1, self.h2_b1, self.h2_w2, self.h2_b2))


if __name__ == "__main__":
    key = jax.random.PRNGKey(0)
    k_params, k_in, k_batch = jax.random.split(key, 3)

    model = Classifier2HeadPallas(k_params, num_actors=3, max_size=8,
                                  input_size=128, hidden_size=128)

    # Deterministic stand-in for the encoder output (seq=5 frames).
    seq = 5
    enc_out = jax.random.normal(k_in, (seq, model.input_size), jnp.float32)

    # --- single-input path ---
    y1, y2 = model.forward(enc_out)
    jax.block_until_ready((y1, y2))

    r1, r2 = model.forward_ref(enc_out)
    assert y1.shape == (1, model.num_actors) and y2.shape == (1, model.num_actors)
    # bf16 W1 operands -> loosened tolerance vs. the f32 reference.
    assert jnp.allclose(y1, r1, atol=2e-2, rtol=2e-2)
    assert jnp.allclose(y2, r2, atol=2e-2, rtol=2e-2)

    # --- batched path (amortizes the W1 DMA over B calls) ---
    B = 4
    enc_batch = jax.random.normal(k_batch, (B, seq, model.input_size), jnp.float32)
    yb1, yb2 = model.forward_batched(enc_batch)
    jax.block_until_ready((yb1, yb2))
    assert yb1.shape == (B, model.num_actors) and yb2.shape == (B, model.num_actors)
    for i in range(B):
        ri1, ri2 = model.forward_ref(enc_batch[i])
        assert jnp.allclose(yb1[i:i + 1], ri1, atol=2e-2, rtol=2e-2)
        assert jnp.allclose(yb2[i:i + 1], ri2, atol=2e-2, rtol=2e-2)

    print("KERNEL_OK")
</pallas_src>

<mosaic_0001>
module attributes {stable_mosaic.version = 11 : i64} {
  func.func @_fused_heads_kernel(%arg0: i32, %arg1: memref<1x1024xf32, #tpu.memory_space<vmem>>, %arg2: memref<1024x256xbf16, #tpu.memory_space<vmem>>, %arg3: memref<1x256xf32, #tpu.memory_space<vmem>>, %arg4: memref<256x6xf32, #tpu.memory_space<vmem>>, %arg5: memref<1x6xf32, #tpu.memory_space<vmem>>, %arg6: memref<1x6xf32, #tpu.memory_space<vmem>>) attributes {dimension_semantics = [#tpu.dimension_semantics<arbitrary>], iteration_bounds = array<i64: 1>, scalar_prefetch = 0 : i64, scratch_operands = 0 : i64, tpu.core_type = #tpu.core_type<tc>, window_params = [{pipeline_mode = #tpu.pipeline_mode<synchronous>, transform_indices = @transform_0, window_bounds = array<i64: 1, 1024>}, {pipeline_mode = #tpu.pipeline_mode<synchronous>, transform_indices = @transform_1, window_bounds = array<i64: 1024, 256>}, {pipeline_mode = #tpu.pipeline_mode<synchronous>, transform_indices = @transform_2, window_bounds = array<i64: 1, 256>}, {pipeline_mode = #tpu.pipeline_mode<synchronous>, transform_indices = @transform_3, window_bounds = array<i64: 256, 6>}, {pipeline_mode = #tpu.pipeline_mode<synchronous>, transform_indices = @transform_4, window_bounds = array<i64: 1, 6>}, {pipeline_mode = #tpu.pipeline_mode<synchronous>, transform_indices = @transform_5, window_bounds = array<i64: 1, 6>}]} {
    %c0 = arith.constant 0 : index
    %c0_0 = arith.constant 0 : index
    %0 = vector.load %arg1[%c0, %c0_0] : memref<1x1024xf32, #tpu.memory_space<vmem>>, vector<1x1024xf32>
    %1 = arith.truncf %0 : vector<1x1024xf32> to vector<1x1024xbf16>
    %c0_1 = arith.constant 0 : index
    %c0_2 = arith.constant 0 : index
    %2 = vector.load %arg2[%c0_1, %c0_2] : memref<1024x256xbf16, #tpu.memory_space<vmem>>, vector<1024x256xbf16>
    %cst = arith.constant dense<0.000000e+00> : vector<1x256xf32>
    %3 = tpu.matmul %1, %2, %cst {dimension_numbers = #tpu.dot_dimension_numbers<[1], [0], [0], [1], [0, 0, 1, 1], [], []>} : vector<1x1024xbf16>, vector<1024x256xbf16>, vector<1x256xf32> -> vector<1x256xf32>
    %c0_3 = arith.constant 0 : index
    %c0_4 = arith.constant 0 : index
    %4 = vector.load %arg3[%c0_3, %c0_4] : memref<1x256xf32, #tpu.memory_space<vmem>>, vector<1x256xf32>
    %5 = arith.addf %3, %4 : vector<1x256xf32>
    %cst_5 = arith.constant 0.000000e+00 : f32
    %6 = vector.broadcast %cst_5 : f32 to vector<1x256xf32>
    %7 = arith.maximumf %5, %6 : vector<1x256xf32>
    %c0_6 = arith.constant 0 : index
    %c0_7 = arith.constant 0 : index
    %8 = vector.load %arg4[%c0_6, %c0_7] : memref<256x6xf32, #tpu.memory_space<vmem>>, vector<256x6xf32>
    %cst_8 = arith.constant dense<0.000000e+00> : vector<1x6xf32>
    %9 = tpu.matmul %7, %8, %cst_8 {dimension_numbers = #tpu.dot_dimension_numbers<[1], [0], [0], [1], [0, 0, 1, 1], [], []>} : vector<1x256xf32>, vector<256x6xf32>, vector<1x6xf32> -> vector<1x6xf32>
    %c0_9 = arith.constant 0 : index
    %c0_10 = arith.constant 0 : index
    %10 = vector.load %arg5[%c0_9, %c0_10] : memref<1x6xf32, #tpu.memory_space<vmem>>, vector<1x6xf32>
    %11 = arith.addf %9, %10 : vector<1x6xf32>
    %12 = arith.negf %11 : vector<1x6xf32>
    %13 = math.exp %12 : vector<1x6xf32>
    %cst_11 = arith.constant 1.000000e+00 : f32
    %14 = vector.broadcast %cst_11 : f32 to vector<1x6xf32>
    %15 = arith.addf %14, %13 : vector<1x6xf32>
    %16 = arith.divf %14, %15 : vector<1x6xf32>
    %c0_12 = arith.constant 0 : index
    %c0_13 = arith.constant 0 : index
    %17 = vector.load %arg6[%c0_12, %c0_13] : memref<1x6xf32, #tpu.memory_space<vmem>>, vector<1x6xf32>
    tpu.vector_store %arg6[%c0_12, %c0_13], %16 {strides = array<i32>} : memref<1x6xf32, #tpu.memory_space<vmem>>, vector<1x6xf32>,
    return
  }
  func.func @transform_0(%arg0: i32) -> (i32, i32) {
    %c0_i32 = arith.constant 0 : i32
    %c0_i32_0 = arith.constant 0 : i32
    %c0_i32_1 = arith.constant 0 : i32
    return %c0_i32, %c0_i32_0 : i32, i32
  }
  func.func @transform_1(%arg0: i32) -> (i32, i32) {
    %c0_i32 = arith.constant 0 : i32
    %c0_i32_0 = arith.constant 0 : i32
    %c0_i32_1 = arith.constant 0 : i32
    return %c0_i32, %c0_i32_0 : i32, i32
  }
  func.func @transform_2(%arg0: i32) -> (i32, i32) {
    %c0_i32 = arith.constant 0 : i32
    %c0_i32_0 = arith.constant 0 : i32
    %c0_i32_1 = arith.constant 0 : i32
    return %c0_i32, %c0_i32_0 : i32, i32
  }
  func.func @transform_3(%arg0: i32) -> (i32, i32) {
    %c0_i32 = arith.constant 0 : i32
    %c0_i32_0 = arith.constant 0 : i32
    %c0_i32_1 = arith.constant 0 : i32
    return %c0_i32, %c0_i32_0 : i32, i32
  }
  func.func @transform_4(%arg0: i32) -> (i32, i32) {
    %c0_i32 = arith.constant 0 : i32
    %c0_i32_0 = arith.constant 0 : i32
    %c0_i32_1 = arith.constant 0 : i32
    return %c0_i32, %c0_i32_0 : i32, i32
  }
  func.func @transform_5(%arg0: i32) -> (i32, i32) {
    %c0_i32 = arith.constant 0 : i32
    %c0_i32_0 = arith.constant 0 : i32
    %c0_i32_1 = arith.constant 0 : i32
    return %c0_i32, %c0_i32_0 : i32, i32
  }
}

</mosaic_0001>

<llo_original>
// kernel: tpu_custom_call.1
$region0: #{tpu_custom_call.1}
  #allocation0 [shape = 'u32[]', space=smem, size = 0x4, offset = 0x4, fixed_abs, tag = 'smem constant byte address 0x4 - core index']
  #allocation1 [shape = 'u32[144,128]{1,0:T(1,128)}', space=vmem, size = 0x12000, scoped, tag = 'internal scratch']
  %s0 = inlined_call_operand.vmem [shape: f32[1,1024], index: 0, kind: input, shape index: {}]
  %s1 = inlined_call_operand.hbm [shape: bf16[1024,256], index: 1, kind: input, shape index: {}]
  %s2 = inlined_call_operand.vmem [shape: f32[1,256], index: 2, kind: input, shape index: {}]
  %s3 = inlined_call_operand.vmem [shape: f32[256,6], index: 3, kind: input, shape index: {}]
  %s4 = inlined_call_operand.vmem [shape: f32[1,6], index: 4, kind: input, shape index: {}]
  %s5 = inlined_call_operand.hbm [shape: f32[1,6], index: 5, kind: output, shape index: {}]
  %s6 = sld [smem:[#allocation0]]
  $region34: #{tpu_custom_call.1} parent=0
    _
  %s8 = ssub.s32 1, %s6
  %s9 = scalar_select 0, %s8, %s6
  $region1: #{tpu_custom_call.1} parent=0
    #allocation2 [shape = 'u8[524288]{0}', space=vmem, size = 0x80000, scoped, tag = 'input window, operand 1, single buffered']
    #allocation3 [shape = 's32[1]{0}', space=sflag, size = 0x4, scoped, tag = 'scoped memory for tpu_custom_call.1']
    #allocation4 [shape = 's32[1]{0}', space=sflag, size = 0x4, scoped, tag = 'scoped memory for tpu_custom_call.1']
    #allocation5 [shape = 'u8[512]{0}', space=vmem, size = 0x400, scoped, tag = 'output window, operand 0, single buffered']
    %10 = vsyncpa [#allocation3], 0
    %11 = vsyncpa [#allocation4], 0
    // Predicated region
    $region2: #{tpu_custom_call.1} parent=1 // pred_check
      _
    $region3: #{tpu_custom_call.1} parent=1 // pred_check_branch
      %13 = sbr.rel (0) target = $region5
    $region4: #{tpu_custom_call.1} parent=1 // pred_region
      _
    $region5: #{tpu_custom_call.1} parent=1 // pred_fallthru
      _
    // Predicated region
    $region6: #{tpu_custom_call.1} parent=1 // pred_check
      _
    $region7: #{tpu_custom_call.1} parent=1 // pred_check_branch
      %15 = sbr.rel (0) target = $region9
    $region8: #{tpu_custom_call.1} parent=1 // pred_region
      %s17 = ssub.s32 16384, 16384
      %18 = vsyncadd [#allocation3], %s17
      %s19 = sshll.u32 [#allocation2], 4
      %s20 = int_to_ptr.vmem [resolvable:$true] %s19
      %25 = dma.hbm_to_vmem [thread:$0]  %s1, 16384, %s20, [#allocation3], 128, 128, 8
    $region9: #{tpu_custom_call.1} parent=1 // pred_fallthru
      _
    // Predicated region
    $region10: #{tpu_custom_call.1} parent=1 // pred_check
      _
    $region11: #{tpu_custom_call.1} parent=1 // pred_check_branch
      %27 = sbr.rel (0) target = $region13
    $region12: #{tpu_custom_call.1} parent=1 // pred_region
      _
    $region13: #{tpu_custom_call.1} parent=1 // pred_fallthru
      _
    // Predicated region
    $region14: #{tpu_custom_call.1} parent=1 // pred_check
      _
    $region15: #{tpu_custom_call.1} parent=1 // pred_check_branch
      %29 = sbr.rel (0) target = $region17
    $region16: #{tpu_custom_call.1} parent=1 // pred_region
      _
    $region17: #{tpu_custom_call.1} parent=1 // pred_fallthru
      _
    // Predicated region
    $region18: #{tpu_custom_call.1} parent=1 // pred_check
      _
    $region19: #{tpu_custom_call.1} parent=1 // pred_check_branch
      %31 = sbr.rel (0) target = $region21
    $region20: #{tpu_custom_call.1} parent=1 // pred_region
      _
    $region21: #{tpu_custom_call.1} parent=1 // pred_fallthru
      _
    // Predicated region
    $region22: #{tpu_custom_call.1} parent=1 // pred_check
      _
    $region23: #{tpu_custom_call.1} parent=1 // pred_check_branch
      %33 = sbr.rel (0) target = $region25
    $region24: #{tpu_custom_call.1} parent=1 // pred_region
      %34 = dma.done [#allocation3], 16384
    $region25: #{tpu_custom_call.1} parent=1 // pred_fallthru
      _
    %v35 = vld [vmem:[%s0] sm:$0xff]
    %v37 = vlaneseq
    %v38 = vshrl.u32 %v37, 7
    %v39 = vsub.s32 0, %v38
    %v40 = vrot.slane %v35, %v39
    %v41 = vlaneseq
    %v42 = vshrl.u32 %v41, 7
    %v43 = vsub.s32 1, %v42
    %v44 = vrot.slane %v35, %v43
    %v45 = vlaneseq
    %v46 = vshrl.u32 %v45, 7
    %v47 = vsub.s32 2, %v46
    %v48 = vrot.slane %v35, %v47
    %v49 = vlaneseq
    %v50 = vshrl.u32 %v49, 7
    %v51 = vsub.s32 3, %v50
    %v52 = vrot.slane %v35, %v51
    %v53 = vlaneseq
    %v54 = vshrl.u32 %v53, 7
    %v55 = vsub.s32 4, %v54
    %v56 = vrot.slane %v35, %v55
    %v57 = vlaneseq
    %v58 = vshrl.u32 %v57, 7
    %v59 = vsub.s32 5, %v58
    %v60 = vrot.slane %v35, %v59
    %v61 = vlaneseq
    %v62 = vshrl.u32 %v61, 7
    %v63 = vsub.s32 6, %v62
    %v64 = vrot.slane %v35, %v63
    %v65 = vlaneseq
    %v66 = vshrl.u32 %v65, 7
    %v67 = vsub.s32 7, %v66
    %v68 = vrot.slane %v35, %v67
    %v77 = vpack.c.bf16 %v40, %v40
    %v78 = vpack.c.bf16 %v44, %v44
    %v79 = vpack.c.bf16 %v48, %v48
    %v80 = vpack.c.bf16 %v52, %v52
    %v81 = vpack.c.bf16 %v56, %v56
    %v82 = vpack.c.bf16 %v60, %v60
    %v83 = vpack.c.bf16 %v64, %v64
    %v84 = vpack.c.bf16 %v68, %v68
    %v85 = vld [vmem:[#allocation2] sm:$0xff]
    %v86 = vld [vmem:[#allocation2 + $0x8] sm:$0xff]
    %v87 = vld [vmem:[#allocation2 + $0x10] sm:$0xff]
    %v88 = vld [vmem:[#allocation2 + $0x18] sm:$0xff]
    %v89 = vld [vmem:[#allocation2 + $0x20] sm:$0xff]
    %v90 = vld [vmem:[#allocation2 + $0x28] sm:$0xff]
    %v91 = vld [vmem:[#allocation2 + $0x30] sm:$0xff]
    %v92 = vld [vmem:[#allocation2 + $0x38] sm:$0xff]
    %v93 = vld [vmem:[#allocation2 + $0x40] sm:$0xff]
    %v94 = vld [vmem:[#allocation2 + $0x48] sm:$0xff]
    %v95 = vld [vmem:[#allocation2 + $0x50] sm:$0xff]
    %v96 = vld [vmem:[#allocation2 + $0x58] sm:$0xff]
    %v97 = vld [vmem:[#allocation2 + $0x60] sm:$0xff]
    %v98 = vld [vmem:[#allocation2 + $0x68] sm:$0xff]
    %v99 = vld [vmem:[#allocation2 + $0x70] sm:$0xff]
    %v100 = vld [vmem:[#allocation2 + $0x78] sm:$0xff]
    %v101 = vld [vmem:[#allocation2 + $0x80] sm:$0xff]
    %v102 = vld [vmem:[#allocation2 + $0x88] sm:$0xff]
    %v103 = vld [vmem:[#allocation2 + $0x90] sm:$0xff]
    %v104 = vld [vmem:[#allocation2 + $0x98] sm:$0xff]
    %v105 = vld [vmem:[#allocation2 + $0xa0] sm:$0xff]
    %v106 = vld [vmem:[#allocation2 + $0xa8] sm:$0xff]
    %v107 = vld [vmem:[#allocation2 + $0xb0] sm:$0xff]
    %v108 = vld [vmem:[#allocation2 + $0xb8] sm:$0xff]
    %v109 = vld [vmem:[#allocation2 + $0xc0] sm:$0xff]
    %v110 = vld [vmem:[#allocation2 + $0xc8] sm:$0xff]
    %v111 = vld [vmem:[#allocation2 + $0xd0] sm:$0xff]
    %v112 = vld [vmem:[#allocation2 + $0xd8] sm:$0xff]
    %v113 = vld [vmem:[#allocation2 + $0xe0] sm:$0xff]
    %v114 = vld [vmem:[#allocation2 + $0xe8] sm:$0xff]
    %v115 = vld [vmem:[#allocation2 + $0xf0] sm:$0xff]
    %v116 = vld [vmem:[#allocation2 + $0xf8] sm:$0xff]
    %v117 = vld [vmem:[#allocation2 + $0x100] sm:$0xff]
    %v118 = vld [vmem:[#allocation2 + $0x108] sm:$0xff]
    %v119 = vld [vmem:[#allocation2 + $0x110] sm:$0xff]
    %v120 = vld [vmem:[#allocation2 + $0x118] sm:$0xff]
    %v121 = vld [vmem:[#allocation2 + $0x120] sm:$0xff]
    %v122 = vld [vmem:[#allocation2 + $0x128] sm:$0xff]
    %v123 = vld [vmem:[#allocation2 + $0x130] sm:$0xff]
    %v124 = vld [vmem:[#allocation2 + $0x138] sm:$0xff]
    %v125 = vld [vmem:[#allocation2 + $0x140] sm:$0xff]
    %v126 = vld [vmem:[#allocation2 + $0x148] sm:$0xff]
    %v127 = vld [vmem:[#allocation2 + $0x150] sm:$0xff]
    %v128 = vld [vmem:[#allocation2 + $0x158] sm:$0xff]
    %v129 = vld [vmem:[#allocation2 + $0x160] sm:$0xff]
    %v130 = vld [vmem:[#allocation2 + $0x168] sm:$0xff]
    %v131 = vld [vmem:[#allocation2 + $0x170] sm:$0xff]
    %v132 = vld [vmem:[#allocation2 + $0x178] sm:$0xff]
    %v133 = vld [vmem:[#allocation2 + $0x180] sm:$0xff]
    %v134 = vld [vmem:[#allocation2 + $0x188] sm:$0xff]
    %v135 = vld [vmem:[#allocation2 + $0x190] sm:$0xff]
    %v136 = vld [vmem:[#allocation2 + $0x198] sm:$0xff]
    %v137 = vld [vmem:[#allocation2 + $0x1a0] sm:$0xff]
    %v138 = vld [vmem:[#allocation2 + $0x1a8] sm:$0xff]
    %v139 = vld [vmem:[#allocation2 + $0x1b0] sm:$0xff]
    %v140 = vld [vmem:[#allocation2 + $0x1b8] sm:$0xff]
    %v141 = vld [vmem:[#allocation2 + $0x1c0] sm:$0xff]
    %v142 = vld [vmem:[#allocation2 + $0x1c8] sm:$0xff]
    %v143 = vld [vmem:[#allocation2 + $0x1d0] sm:$0xff]
    %v144 = vld [vmem:[#allocation2 + $0x1d8] sm:$0xff]
    %v145 = vld [vmem:[#allocation2 + $0x1e0] sm:$0xff]
    %v146 = vld [vmem:[#allocation2 + $0x1e8] sm:$0xff]
    %v147 = vld [vmem:[#allocation2 + $0x1f0] sm:$0xff]
    %v148 = vld [vmem:[#allocation2 + $0x1f8] sm:$0xff]
    %v149 = vld [vmem:[#allocation2 + $0x200] sm:$0xff]
    %v150 = vld [vmem:[#allocation2 + $0x208] sm:$0xff]
    %v151 = vld [vmem:[#allocation2 + $0x210] sm:$0xff]
    %v152 = vld [vmem:[#allocation2 + $0x218] sm:$0xff]
    %v153 = vld [vmem:[#allocation2 + $0x220] sm:$0xff]
    %v154 = vld [vmem:[#allocation2 + $0x228] sm:$0xff]
    %v155 = vld [vmem:[#allocation2 + $0x230] sm:$0xff]
    %v156 = vld [vmem:[#allocation2 + $0x238] sm:$0xff]
    %v157 = vld [vmem:[#allocation2 + $0x240] sm:$0xff]
    %v158 = vld [vmem:[#allocation2 + $0x248] sm:$0xff]
    %v159 = vld [vmem:[#allocation2 + $0x250] sm:$0xff]
    %v160 = vld [vmem:[#allocation2 + $0x258] sm:$0xff]
    %v161 = vld [vmem:[#allocation2 + $0x260] sm:$0xff]
    %v162 = vld [vmem:[#allocation2 + $0x268] sm:$0xff]
    %v163 = vld [vmem:[#allocation2 + $0x270] sm:$0xff]
    %v164 = vld [vmem:[#allocation2 + $0x278] sm:$0xff]
    %v165 = vld [vmem:[#allocation2 + $0x280] sm:$0xff]
    %v166 = vld [vmem:[#allocation2 + $0x288] sm:$0xff]
    %v167 = vld [vmem:[#allocation2 + $0x290] sm:$0xff]
    %v168 = vld [vmem:[#allocation2 + $0x298] sm:$0xff]
    %v169 = vld [vmem:[#allocation2 + $0x2a0] sm:$0xff]
    %v170 = vld [vmem:[#allocation2 + $0x2a8] sm:$0xff]
    %v171 = vld [vmem:[#allocation2 + $0x2b0] sm:$0xff]
    %v172 = vld [vmem:[#allocation2 + $0x2b8] sm:$0xff]
    %v173 = vld [vmem:[#allocation2 + $0x2c0] sm:$0xff]
    %v174 = vld [vmem:[#allocation2 + $0x2c8] sm:$0xff]
    %v175 = vld [vmem:[#allocation2 + $0x2d0] sm:$0xff]
    %v176 = vld [vmem:[#allocation2 + $0x2d8] sm:$0xff]
    %v177 = vld [vmem:[#allocation2 + $0x2e0] sm:$0xff]
    %v178 = vld [vmem:[#allocation2 + $0x2e8] sm:$0xff]
    %v179 = vld [vmem:[#allocation2 + $0x2f0] sm:$0xff]
    %v180 = vld [vmem:[#allocation2 + $0x2f8] sm:$0xff]
    %v181 = vld [vmem:[#allocation2 + $0x300] sm:$0xff]
    %v182 = vld [vmem:[#allocation2 + $0x308] sm:$0xff]
    %v183 = vld [vmem:[#allocation2 + $0x310] sm:$0xff]
    %v184 = vld [vmem:[#allocation2 + $0x318] sm:$0xff]
    %v185 = vld [vmem:[#allocation2 + $0x320] sm:$0xff]
    %v186 = vld [vmem:[#allocation2 + $0x328] sm:$0xff]
    %v187 = vld [vmem:[#allocation2 + $0x330] sm:$0xff]
    %v188 = vld [vmem:[#allocation2 + $0x338] sm:$0xff]
    %v189 = vld [vmem:[#allocation2 + $0x340] sm:$0xff]
    %v190 = vld [vmem:[#allocation2 + $0x348] sm:$0xff]
    %v191 = vld [vmem:[#allocation2 + $0x350] sm:$0xff]
    %v192 = vld [vmem:[#allocation2 + $0x358] sm:$0xff]
    %v193 = vld [vmem:[#allocation2 + $0x360] sm:$0xff]
    %v194 = vld [vmem:[#allocation2 + $0x368] sm:$0xff]
    %v195 = vld [vmem:[#allocation2 + $0x370] sm:$0xff]
    %v196 = vld [vmem:[#allocation2 + $0x378] sm:$0xff]
    %v197 = vld [vmem:[#allocation2 + $0x380] sm:$0xff]
    %v198 = vld [vmem:[#allocation2 + $0x388] sm:$0xff]
    %v199 = vld [vmem:[#allocation2 + $0x390] sm:$0xff]
    %v200 = vld [vmem:[#allocation2 + $0x398] sm:$0xff]
    %v201 = vld [vmem:[#allocation2 + $0x3a0] sm:$0xff]
    %v202 = vld [vmem:[#allocation2 + $0x3a8] sm:$0xff]
    %v203 = vld [vmem:[#allocation2 + $0x3b0] sm:$0xff]
    %v204 = vld [vmem:[#allocation2 + $0x3b8] sm:$0xff]
    %v205 = vld [vmem:[#allocation2 + $0x3c0] sm:$0xff]
    %v206 = vld [vmem:[#allocation2 + $0x3c8] sm:$0xff]
    %v207 = vld [vmem:[#allocation2 + $0x3d0] sm:$0xff]
    %v208 = vld [vmem:[#allocation2 + $0x3d8] sm:$0xff]
    %v209 = vld [vmem:[#allocation2 + $0x3e0] sm:$0xff]
    %v210 = vld [vmem:[#allocation2 + $0x3e8] sm:$0xff]
    %v211 = vld [vmem:[#allocation2 + $0x3f0] sm:$0xff]
    %v212 = vld [vmem:[#allocation2 + $0x3f8] sm:$0xff]
    %v213 = vld [vmem:[%s2] sm:$0x3]
    %v342 = vunpack.c.l.b16 %v85
    %v343 = vunpack.c.h.b16 %v85
    %v344 = vunpack.c.l.b16 %v86
    %v345 = vunpack.c.h.b16 %v86
    %v346 = vunpack.c.l.b16 %v87
    %v347 = vunpack.c.h.b16 %v87
    %v348 = vunpack.c.l.b16 %v88
    %v349 = vunpack.c.h.b16 %v88
    %v350 = vunpack.c.l.b16 %v89
    %v351 = vunpack.c.h.b16 %v89
    %v352 = vunpack.c.l.b16 %v90
    %v353 = vunpack.c.h.b16 %v90
    %v354 = vunpack.c.l.b16 %v91
    %v355 = vunpack.c.h.b16 %v91
    %v356 = vunpack.c.l.b16 %v92
    %v357 = vunpack.c.h.b16 %v92
    %v358 = vunpack.c.l.b16 %v93
    %v359 = vunpack.c.h.b16 %v93
    %v360 = vunpack.c.l.b16 %v94
    %v361 = vunpack.c.h.b16 %v94
    %v362 = vunpack.c.l.b16 %v95
    %v363 = vunpack.c.h.b16 %v95
    %v364 = vunpack.c.l.b16 %v96
    %v365 = vunpack.c.h.b16 %v96
    %v366 = vunpack.c.l.b16 %v97
    %v367 = vunpack.c.h.b16 %v97
    %v368 = vunpack.c.l.b16 %v98
    %v369 = vunpack.c.h.b16 %v98
    %v370 = vunpack.c.l.b16 %v99
    %v371 = vunpack.c.h.b16 %v99
    %v372 = vunpack.c.l.b16 %v100
    %v373 = vunpack.c.h.b16 %v100
    %v374 = vunpack.c.l.b16 %v101
    %v375 = vunpack.c.h.b16 %v101
    %v376 = vunpack.c.l.b16 %v102
    %v377 = vunpack.c.h.b16 %v102
    %v378 = vunpack.c.l.b16 %v103
    %v379 = vunpack.c.h.b16 %v103
    %v380 = vunpack.c.l.b16 %v104
    %v381 = vunpack.c.h.b16 %v104
    %v382 = vunpack.c.l.b16 %v105
    %v383 = vunpack.c.h.b16 %v105
    %v384 = vunpack.c.l.b16 %v106
    %v385 = vunpack.c.h.b16 %v106
    %v386 = vunpack.c.l.b16 %v107
    %v387 = vunpack.c.h.b16 %v107
    %v388 = vunpack.c.l.b16 %v108
    %v389 = vunpack.c.h.b16 %v108
    %v390 = vunpack.c.l.b16 %v109
    %v391 = vunpack.c.h.b16 %v109
    %v392 = vunpack.c.l.b16 %v110
    %v393 = vunpack.c.h.b16 %v110
    %v394 = vunpack.c.l.b16 %v111
    %v395 = vunpack.c.h.b16 %v111
    %v396 = vunpack.c.l.b16 %v112
    %v397 = vunpack.c.h.b16 %v112
    %v398 = vunpack.c.l.b16 %v113
    %v399 = vunpack.c.h.b16 %v113
    %v400 = vunpack.c.l.b16 %v114
    %v401 = vunpack.c.h.b16 %v114
    %v402 = vunpack.c.l.b16 %v115
    %v403 = vunpack.c.h.b16 %v115
    %v404 = vunpack.c.l.b16 %v116
    %v405 = vunpack.c.h.b16 %v116
    %v406 = vunpack.c.l.b16 %v117
    %v407 = vunpack.c.h.b16 %v117
    %v408 = vunpack.c.l.b16 %v118
    %v409 = vunpack.c.h.b16 %v118
    %v410 = vunpack.c.l.b16 %v119
    %v411 = vunpack.c.h.b16 %v119
    %v412 = vunpack.c.l.b16 %v120
    %v413 = vunpack.c.h.b16 %v120
    %v414 = vunpack.c.l.b16 %v121
    %v415 = vunpack.c.h.b16 %v121
    %v416 = vunpack.c.l.b16 %v122
    %v417 = vunpack.c.h.b16 %v122
    %v418 = vunpack.c.l.b16 %v123
    %v419 = vunpack.c.h.b16 %v123
    %v420 = vunpack.c.l.b16 %v124
    %v421 = vunpack.c.h.b16 %v124
    %v422 = vunpack.c.l.b16 %v125
    %v423 = vunpack.c.h.b16 %v125
    %v424 = vunpack.c.l.b16 %v126
    %v425 = vunpack.c.h.b16 %v126
    %v426 = vunpack.c.l.b16 %v127
    %v427 = vunpack.c.h.b16 %v127
    %v428 = vunpack.c.l.b16 %v128
    %v429 = vunpack.c.h.b16 %v128
    %v430 = vunpack.c.l.b16 %v129
    %v431 = vunpack.c.h.b16 %v129
    %v432 = vunpack.c.l.b16 %v130
    %v433 = vunpack.c.h.b16 %v130
    %v434 = vunpack.c.l.b16 %v131
    %v435 = vunpack.c.h.b16 %v131
    %v436 = vunpack.c.l.b16 %v132
    %v437 = vunpack.c.h.b16 %v132
    %v438 = vunpack.c.l.b16 %v133
    %v439 = vunpack.c.h.b16 %v133
    %v440 = vunpack.c.l.b16 %v134
    %v441 = vunpack.c.h.b16 %v134
    %v442 = vunpack.c.l.b16 %v135
    %v443 = vunpack.c.h.b16 %v135
    %v444 = vunpack.c.l.b16 %v136
    %v445 = vunpack.c.h.b16 %v136
    %v446 = vunpack.c.l.b16 %v137
    %v447 = vunpack.c.h.b16 %v137
    %v448 = vunpack.c.l.b16 %v138
    %v449 = vunpack.c.h.b16 %v138
    %v450 = vunpack.c.l.b16 %v139
    %v451 = vunpack.c.h.b16 %v139
    %v452 = vunpack.c.l.b16 %v140
    %v453 = vunpack.c.h.b16 %v140
    %v454 = vunpack.c.l.b16 %v141
    %v455 = vunpack.c.h.b16 %v141
    %v456 = vunpack.c.l.b16 %v142
    %v457 = vunpack.c.h.b16 %v142
    %v458 = vunpack.c.l.b16 %v143
    %v459 = vunpack.c.h.b16 %v143
    %v460 = vunpack.c.l.b16 %v144
    %v461 = vunpack.c.h.b16 %v144
    %v462 = vunpack.c.l.b16 %v145
    %v463 = vunpack.c.h.b16 %v145
    %v464 = vunpack.c.l.b16 %v146
    %v465 = vunpack.c.h.b16 %v146
    %v466 = vunpack.c.l.b16 %v147
    %v467 = vunpack.c.h.b16 %v147
    %v468 = vunpack.c.l.b16 %v148
    %v469 = vunpack.c.h.b16 %v148
    %v470 = vunpack.c.l.b16 %v149
    %v471 = vunpack.c.h.b16 %v149
    %v472 = vunpack.c.l.b16 %v150
    %v473 = vunpack.c.h.b16 %v150
    %v474 = vunpack.c.l.b16 %v151
    %v475 = vunpack.c.h.b16 %v151
    %v476 = vunpack.c.l.b16 %v152
    %v477 = vunpack.c.h.b16 %v152
    %v478 = vunpack.c.l.b16 %v153
    %v479 = vunpack.c.h.b16 %v153
    %v480 = vunpack.c.l.b16 %v154
    %v481 = vunpack.c.h.b16 %v154
    %v482 = vunpack.c.l.b16 %v155
    %v483 = vunpack.c.h.b16 %v155
    %v484 = vunpack.c.l.b16 %v156
    %v485 = vunpack.c.h.b16 %v156
    %v486 = vunpack.c.l.b16 %v157
    %v487 = vunpack.c.h.b16 %v157
    %v488 = vunpack.c.l.b16 %v158
    %v489 = vunpack.c.h.b16 %v158
    %v490 = vunpack.c.l.b16 %v159
    %v491 = vunpack.c.h.b16 %v159
    %v492 = vunpack.c.l.b16 %v160
    %v493 = vunpack.c.h.b16 %v160
    %v494 = vunpack.c.l.b16 %v161
    %v495 = vunpack.c.h.b16 %v161
    %v496 = vunpack.c.l.b16 %v162
    %v497 = vunpack.c.h.b16 %v162
    %v498 = vunpack.c.l.b16 %v163
    %v499 = vunpack.c.h.b16 %v163
    %v500 = vunpack.c.l.b16 %v164
    %v501 = vunpack.c.h.b16 %v164
    %v502 = vunpack.c.l.b16 %v165
    %v503 = vunpack.c.h.b16 %v165
    %v504 = vunpack.c.l.b16 %v166
    %v505 = vunpack.c.h.b16 %v166
    %v506 = vunpack.c.l.b16 %v167
    %v507 = vunpack.c.h.b16 %v167
    %v508 = vunpack.c.l.b16 %v168
    %v509 = vunpack.c.h.b16 %v168
    %v510 = vunpack.c.l.b16 %v169
    %v511 = vunpack.c.h.b16 %v169
    %v512 = vunpack.c.l.b16 %v170
    %v513 = vunpack.c.h.b16 %v170
    %v514 = vunpack.c.l.b16 %v171
    %v515 = vunpack.c.h.b16 %v171
    %v516 = vunpack.c.l.b16 %v172
    %v517 = vunpack.c.h.b16 %v172
    %v518 = vunpack.c.l.b16 %v173
    %v519 = vunpack.c.h.b16 %v173
    %v520 = vunpack.c.l.b16 %v174
    %v521 = vunpack.c.h.b16 %v174
    %v522 = vunpack.c.l.b16 %v175
    %v523 = vunpack.c.h.b16 %v175
    %v524 = vunpack.c.l.b16 %v176
    %v525 = vunpack.c.h.b16 %v176
    %v526 = vunpack.c.l.b16 %v177
    %v527 = vunpack.c.h.b16 %v177
    %v528 = vunpack.c.l.b16 %v178
    %v529 = vunpack.c.h.b16 %v178
    %v530 = vunpack.c.l.b16 %v179
    %v531 = vunpack.c.h.b16 %v179
    %v532 = vunpack.c.l.b16 %v180
    %v533 = vunpack.c.h.b16 %v180
    %v534 = vunpack.c.l.b16 %v181
    %v535 = vunpack.c.h.b16 %v181
    %v536 = vunpack.c.l.b16 %v182
    %v537 = vunpack.c.h.b16 %v182
    %v538 = vunpack.c.l.b16 %v183
    %v539 = vunpack.c.h.b16 %v183
    %v540 = vunpack.c.l.b16 %v184
    %v541 = vunpack.c.h.b16 %v184
    %v542 = vunpack.c.l.b16 %v185
    %v543 = vunpack.c.h.b16 %v185
    %v544 = vunpack.c.l.b16 %v186
    %v545 = vunpack.c.h.b16 %v186
    %v546 = vunpack.c.l.b16 %v187
    %v547 = vunpack.c.h.b16 %v187
    %v548 = vunpack.c.l.b16 %v188
    %v549 = vunpack.c.h.b16 %v188
    %v550 = vunpack.c.l.b16 %v189
    %v551 = vunpack.c.h.b16 %v189
    %v552 = vunpack.c.l.b16 %v190
    %v553 = vunpack.c.h.b16 %v190
    %v554 = vunpack.c.l.b16 %v191
    %v555 = vunpack.c.h.b16 %v191
    %v556 = vunpack.c.l.b16 %v192
    %v557 = vunpack.c.h.b16 %v192
    %v558 = vunpack.c.l.b16 %v193
    %v559 = vunpack.c.h.b16 %v193
    %v560 = vunpack.c.l.b16 %v194
    %v561 = vunpack.c.h.b16 %v194
    %v562 = vunpack.c.l.b16 %v195
    %v563 = vunpack.c.h.b16 %v195
    %v564 = vunpack.c.l.b16 %v196
    %v565 = vunpack.c.h.b16 %v196
    %v566 = vunpack.c.l.b16 %v197
    %v567 = vunpack.c.h.b16 %v197
    %v568 = vunpack.c.l.b16 %v198
    %v569 = vunpack.c.h.b16 %v198
    %v570 = vunpack.c.l.b16 %v199
    %v571 = vunpack.c.h.b16 %v199
    %v572 = vunpack.c.l.b16 %v200
    %v573 = vunpack.c.h.b16 %v200
    %v574 = vunpack.c.l.b16 %v201
    %v575 = vunpack.c.h.b16 %v201
    %v576 = vunpack.c.l.b16 %v202
    %v577 = vunpack.c.h.b16 %v202
    %v578 = vunpack.c.l.b16 %v203
    %v579 = vunpack.c.h.b16 %v203
    %v580 = vunpack.c.l.b16 %v204
    %v581 = vunpack.c.h.b16 %v204
    %v582 = vunpack.c.l.b16 %v205
    %v583 = vunpack.c.h.b16 %v205
    %v584 = vunpack.c.l.b16 %v206
    %v585 = vunpack.c.h.b16 %v206
    %v586 = vunpack.c.l.b16 %v207
    %v587 = vunpack.c.h.b16 %v207
    %v588 = vunpack.c.l.b16 %v208
    %v589 = vunpack.c.h.b16 %v208
    %v590 = vunpack.c.l.b16 %v209
    %v591 = vunpack.c.h.b16 %v209
    %v592 = vunpack.c.l.b16 %v210
    %v593 = vunpack.c.h.b16 %v210
    %v594 = vunpack.c.l.b16 %v211
    %v595 = vunpack.c.h.b16 %v211
    %v596 = vunpack.c.l.b16 %v212
    %v597 = vunpack.c.h.b16 %v212
    %v598 = vpack.c.b16 %v344, %v342
    %v599 = vpack.c.b16 %v345, %v343
    %v600 = vpack.c.b16 %v348, %v346
    %v601 = vpack.c.b16 %v349, %v347
    %v602 = vpack.c.b16 %v352, %v350
    %v603 = vpack.c.b16 %v353, %v351
    %v604 = vpack.c.b16 %v356, %v354
    %v605 = vpack.c.b16 %v357, %v355
    %v606 = vpack.c.b16 %v360, %v358
    %v607 = vpack.c.b16 %v361, %v359
    %v608 = vpack.c.b16 %v364, %v362
    %v609 = vpack.c.b16 %v365, %v363
    %v610 = vpack.c.b16 %v368, %v366
    %v611 = vpack.c.b16 %v369, %v367
    %v612 = vpack.c.b16 %v372, %v370
    %v613 = vpack.c.b16 %v373, %v371
    %v614 = vpack.c.b16 %v376, %v374
    %v615 = vpack.c.b16 %v377, %v375
    %v616 = vpack.c.b16 %v380, %v378
    %v617 = vpack.c.b16 %v381, %v379
    %v618 = vpack.c.b16 %v384, %v382
    %v619 = vpack.c.b16 %v385, %v383
    %v620 = vpack.c.b16 %v388, %v386
    %v621 = vpack.c.b16 %v389, %v387
    %v622 = vpack.c.b16 %v392, %v390
    %v623 = vpack.c.b16 %v393, %v391
    %v624 = vpack.c.b16 %v396, %v394
    %v625 = vpack.c.b16 %v397, %v395
    %v626 = vpack.c.b16 %v400, %v398
    %v627 = vpack.c.b16 %v401, %v399
    %v628 = vpack.c.b16 %v404, %v402
    %v629 = vpack.c.b16 %v405, %v403
    %v630 = vpack.c.b16 %v408, %v406
    %v631 = vpack.c.b16 %v409, %v407
    %v632 = vpack.c.b16 %v412, %v410
    %v633 = vpack.c.b16 %v413, %v411
    %v634 = vpack.c.b16 %v416, %v414
    %v635 = vpack.c.b16 %v417, %v415
    %v636 = vpack.c.b16 %v420, %v418
    %v637 = vpack.c.b16 %v421, %v419
    %v638 = vpack.c.b16 %v424, %v422
    %v639 = vpack.c.b16 %v425, %v423
    %v640 = vpack.c.b16 %v428, %v426
    %v641 = vpack.c.b16 %v429, %v427
    %v642 = vpack.c.b16 %v432, %v430
    %v643 = vpack.c.b16 %v433, %v431
    %v644 = vpack.c.b16 %v436, %v434
    %v645 = vpack.c.b16 %v437, %v435
    %v646 = vpack.c.b16 %v440, %v438
    %v647 = vpack.c.b16 %v441, %v439
    %v648 = vpack.c.b16 %v444, %v442
    %v649 = vpack.c.b16 %v445, %v443
    %v650 = vpack.c.b16 %v448, %v446
    %v651 = vpack.c.b16 %v449, %v447
    %v652 = vpack.c.b16 %v452, %v450
    %v653 = vpack.c.b16 %v453, %v451
    %v654 = vpack.c.b16 %v456, %v454
    %v655 = vpack.c.b16 %v457, %v455
    %v656 = vpack.c.b16 %v460, %v458
    %v657 = vpack.c.b16 %v461, %v459
    %v658 = vpack.c.b16 %v464, %v462
    %v659 = vpack.c.b16 %v465, %v463
    %v660 = vpack.c.b16 %v468, %v466
    %v661 = vpack.c.b16 %v469, %v467
    %v662 = vpack.c.b16 %v472, %v470
    %v663 = vpack.c.b16 %v473, %v471
    %v664 = vpack.c.b16 %v476, %v474
    %v665 = vpack.c.b16 %v477, %v475
    %v666 = vpack.c.b16 %v480, %v478
    %v667 = vpack.c.b16 %v481, %v479
    %v668 = vpack.c.b16 %v484, %v482
    %v669 = vpack.c.b16 %v485, %v483
    %v670 = vpack.c.b16 %v488, %v486
    %v671 = vpack.c.b16 %v489, %v487
    %v672 = vpack.c.b16 %v492, %v490
    %v673 = vpack.c.b16 %v493, %v491
    %v674 = vpack.c.b16 %v496, %v494
    %v675 = vpack.c.b16 %v497, %v495
    %v676 = vpack.c.b16 %v500, %v498
    %v677 = vpack.c.b16 %v501, %v499
    %v678 = vpack.c.b16 %v504, %v502
    %v679 = vpack.c.b16 %v505, %v503
    %v680 = vpack.c.b16 %v508, %v506
    %v681 = vpack.c.b16 %v509, %v507
    %v682 = vpack.c.b16 %v512, %v510
    %v683 = vpack.c.b16 %v513, %v511
    %v684 = vpack.c.b16 %v516, %v514
    %v685 = vpack.c.b16 %v517, %v515
    %v686 = vpack.c.b16 %v520, %v518
    %v687 = vpack.c.b16 %v521, %v519
    %v688 = vpack.c.b16 %v524, %v522
    %v689 = vpack.c.b16 %v525, %v523
    %v690 = vpack.c.b16 %v528, %v526
    %v691 = vpack.c.b16 %v529, %v527
    %v692 = vpack.c.b16 %v532, %v530
    %v693 = vpack.c.b16 %v533, %v531
    %v694 = vpack.c.b16 %v536, %v534
    %v695 = vpack.c.b16 %v537, %v535
    %v696 = vpack.c.b16 %v540, %v538
    %v697 = vpack.c.b16 %v541, %v539
    %v698 = vpack.c.b16 %v544, %v542
    %v699 = vpack.c.b16 %v545, %v543
    %v700 = vpack.c.b16 %v548, %v546
    %v701 = vpack.c.b16 %v549, %v547
    %v702 = vpack.c.b16 %v552, %v550
    %v703 = vpack.c.b16 %v553, %v551
    %v704 = vpack.c.b16 %v556, %v554
    %v705 = vpack.c.b16 %v557, %v555
    %v706 = vpack.c.b16 %v560, %v558
    %v707 = vpack.c.b16 %v561, %v559
    %v708 = vpack.c.b16 %v564, %v562
    %v709 = vpack.c.b16 %v565, %v563
    %v710 = vpack.c.b16 %v568, %v566
    %v711 = vpack.c.b16 %v569, %v567
    %v712 = vpack.c.b16 %v572, %v570
    %v713 = vpack.c.b16 %v573, %v571
    %v714 = vpack.c.b16 %v576, %v574
    %v715 = vpack.c.b16 %v577, %v575
    %v716 = vpack.c.b16 %v580, %v578
    %v717 = vpack.c.b16 %v581, %v579
    %v718 = vpack.c.b16 %v584, %v582
    %v719 = vpack.c.b16 %v585, %v583
    %v720 = vpack.c.b16 %v588, %v586
    %v721 = vpack.c.b16 %v589, %v587
    %v722 = vpack.c.b16 %v592, %v590
    %v723 = vpack.c.b16 %v593, %v591
    %v724 = vpack.c.b16 %v596, %v594
    %v725 = vpack.c.b16 %v597, %v595
    %v855 = vlaneseq
    %v856 = vshrl.u32 %v855, 7
    %v857 = vsub.s32 0, %v856
    %v858 = vrot.slane %v213, %v857
    %v859 = vlaneseq
    %v860 = vshrl.u32 %v859, 7
    %v861 = vsub.s32 1, %v860
    %v862 = vrot.slane %v213, %v861
    %865 = vmatprep.subr.bf16.mxu0 %v599
    %866 = vmatpush1.bf16.msra.mxu0 %v598
    %867 = vmatprep.subr.bf16.mxu0 %v601
    %868 = vmatpush1.bf16.msra.mxu0 %v600
    %869 = vmatprep.subr.bf16.mxu0 %v603
    %870 = vmatpush1.bf16.msra.mxu0 %v602
    %871 = vmatprep.subr.bf16.mxu0 %v605
    %872 = vmatpush1.bf16.msra.mxu0 %v604
    %873 = vmatprep.subr.bf16.mxu0 %v607
    %874 = vmatpush1.bf16.msra.mxu0 %v606
    %875 = vmatprep.subr.bf16.mxu0 %v609
    %876 = vmatpush1.bf16.msra.mxu0 %v608
    %877 = vmatprep.subr.bf16.mxu0 %v611
    %878 = vmatpush1.bf16.msra.mxu0 %v610
    %879 = vmatprep.subr.bf16.mxu0 %v613
    %880 = vmatpush1.bf16.msra.mxu0 %v612
    %881 = vmatprep.subr.bf16.mxu0 %v615
    %882 = vmatpush1.bf16.msra.mxu0 %v614
    %883 = vmatprep.subr.bf16.mxu0 %v617
    %884 = vmatpush1.bf16.msra.mxu0 %v616
    %885 = vmatprep.subr.bf16.mxu0 %v619
    %886 = vmatpush1.bf16.msra.mxu0 %v618
    %887 = vmatprep.subr.bf16.mxu0 %v621
    %888 = vmatpush1.bf16.msra.mxu0 %v620
    %889 = vmatprep.subr.bf16.mxu0 %v623
    %890 = vmatpush1.bf16.msra.mxu0 %v622
    %891 = vmatprep.subr.bf16.mxu0 %v625
    %892 = vmatpush1.bf16.msra.mxu0 %v624
    %893 = vmatprep.subr.bf16.mxu0 %v627
    %894 = vmatpush1.bf16.msra.mxu0 %v626
    %895 = vmatprep.subr.bf16.mxu0 %v629
    %896 = vmatpush1.bf16.msra.mxu0 %v628
    %897 = vmatprep.mubr.bf16.mxu0 %v78
    %898 = vmatmul.mubr.bf16.gmra.mrb[0].mxu0 %v77
    %v899 = vpop.f32.mrb[0].mxu0
    %v900 = vadd.f32 %v858, %v899
    %v901 = vpop.f32.mrb[0].mxu0
    %v902 = vadd.f32 %v862, %v901
    %v903 = vpop.f32.mrb[0].mxu0
    %v904 = vpop.f32.mrb[0].mxu0
    %905 = vdwg.mxu0
    %906 = vmatprep.subr.bf16.mxu0 %v631
    %907 = vmatpush1.bf16.msra.mxu0 %v630
    %908 = vmatprep.subr.bf16.mxu0 %v633
    %909 = vmatpush1.bf16.msra.mxu0 %v632
    %910 = vmatprep.subr.bf16.mxu0 %v635
    %911 = vmatpush1.bf16.msra.mxu0 %v634
    %912 = vmatprep.subr.bf16.mxu0 %v637
    %913 = vmatpush1.bf16.msra.mxu0 %v636
    %914 = vmatprep.subr.bf16.mxu0 %v639
    %915 = vmatpush1.bf16.msra.mxu0 %v638
    %916 = vmatprep.subr.bf16.mxu0 %v641
    %917 = vmatpush1.bf16.msra.mxu0 %v640
    %918 = vmatprep.subr.bf16.mxu0 %v643
    %919 = vmatpush1.bf16.msra.mxu0 %v642
    %920 = vmatprep.subr.bf16.mxu0 %v645
    %921 = vmatpush1.bf16.msra.mxu0 %v644
    %922 = vmatprep.subr.bf16.mxu0 %v647
    %923 = vmatpush1.bf16.msra.mxu0 %v646
    %924 = vmatprep.subr.bf16.mxu0 %v649
    %925 = vmatpush1.bf16.msra.mxu0 %v648
    %926 = vmatprep.subr.bf16.mxu0 %v651
    %927 = vmatpush1.bf16.msra.mxu0 %v650
    %928 = vmatprep.subr.bf16.mxu0 %v653
    %929 = vmatpush1.bf16.msra.mxu0 %v652
    %930 = vmatprep.subr.bf16.mxu0 %v655
    %931 = vmatpush1.bf16.msra.mxu0 %v654
    %932 = vmatprep.subr.bf16.mxu0 %v657
    %933 = vmatpush1.bf16.msra.mxu0 %v656
    %934 = vmatprep.subr.bf16.mxu0 %v659
    %935 = vmatpush1.bf16.msra.mxu0 %v658
    %936 = vmatprep.subr.bf16.mxu0 %v661
    %937 = vmatpush1.bf16.msra.mxu0 %v660
    %938 = vmatprep.mubr.bf16.mxu0 %v80
    %939 = vmatmul.mubr.bf16.gmra.mrb[0].mxu0 %v79
    %v940 = vpop.f32.mrb[0].mxu0
    %v941 = vadd.f32 %v900, %v940
    %v942 = vpop.f32.mrb[0].mxu0
    %v943 = vadd.f32 %v902, %v942
    %v944 = vpop.f32.mrb[0].mxu0
    %v945 = vpop.f32.mrb[0].mxu0
    %946 = vdwg.mxu0
    %947 = vmatprep.subr.bf16.mxu0 %v663
    %948 = vmatpush1.bf16.msra.mxu0 %v662
    %949 = vmatprep.subr.bf16.mxu0 %v665
    %950 = vmatpush1.bf16.msra.mxu0 %v664
    %951 = vmatprep.subr.bf16.mxu0 %v667
    %952 = vmatpush1.bf16.msra.mxu0 %v666
    %953 = vmatprep.subr.bf16.mxu0 %v669
    %954 = vmatpush1.bf16.msra.mxu0 %v668
    %955 = vmatprep.subr.bf16.mxu0 %v671
    %956 = vmatpush1.bf16.msra.mxu0 %v670
    %957 = vmatprep.subr.bf16.mxu0 %v673
    %958 = vmatpush1.bf16.msra.mxu0 %v672
    %959 = vmatprep.subr.bf16.mxu0 %v675
    %960 = vmatpush1.bf16.msra.mxu0 %v674
    %961 = vmatprep.subr.bf16.mxu0 %v677
    %962 = vmatpush1.bf16.msra.mxu0 %v676
    %963 = vmatprep.subr.bf16.mxu0 %v679
    %964 = vmatpush1.bf16.msra.mxu0 %v678
    %965 = vmatprep.subr.bf16.mxu0 %v681
    %966 = vmatpush1.bf16.msra.mxu0 %v680
    %967 = vmatprep.subr.bf16.mxu0 %v683
    %968 = vmatpush1.bf16.msra.mxu0 %v682
    %969 = vmatprep.subr.bf16.mxu0 %v685
    %970 = vmatpush1.bf16.msra.mxu0 %v684
    %971 = vmatprep.subr.bf16.mxu0 %v687
    %972 = vmatpush1.bf16.msra.mxu0 %v686
    %973 = vmatprep.subr.bf16.mxu0 %v689
    %974 = vmatpush1.bf16.msra.mxu0 %v688
    %975 = vmatprep.subr.bf16.mxu0 %v691
    %976 = vmatpush1.bf16.msra.mxu0 %v690
    %977 = vmatprep.subr.bf16.mxu0 %v693
    %978 = vmatpush1.bf16.msra.mxu0 %v692
    %979 = vmatprep.mubr.bf16.mxu0 %v82
    %980 = vmatmul.mubr.bf16.gmra.mrb[0].mxu0 %v81
    %v981 = vpop.f32.mrb[0].mxu0
    %v982 = vadd.f32 %v941, %v981
    %v983 = vpop.f32.mrb[0].mxu0
    %v984 = vadd.f32 %v943, %v983
    %v985 = vpop.f32.mrb[0].mxu0
    %v986 = vpop.f32.mrb[0].mxu0
    %987 = vdwg.mxu0
    %988 = vmatprep.subr.bf16.mxu0 %v695
    %989 = vmatpush1.bf16.msra.mxu0 %v694
    %990 = vmatprep.subr.bf16.mxu0 %v697
    %991 = vmatpush1.bf16.msra.mxu0 %v696
    %992 = vmatprep.subr.bf16.mxu0 %v699
    %993 = vmatpush1.bf16.msra.mxu0 %v698
    %994 = vmatprep.subr.bf16.mxu0 %v701
    %995 = vmatpush1.bf16.msra.mxu0 %v700
    %996 = vmatprep.subr.bf16.mxu0 %v703
    %997 = vmatpush1.bf16.msra.mxu0 %v702
    %998 = vmatprep.subr.bf16.mxu0 %v705
    %999 = vmatpush1.bf16.msra.mxu0 %v704
    %1000 = vmatprep.subr.bf16.mxu0 %v707
    %1001 = vmatpush1.bf16.msra.mxu0 %v706
    %1002 = vmatprep.subr.bf16.mxu0 %v709
    %1003 = vmatpush1.bf16.msra.mxu0 %v708
    %1004 = vmatprep.subr.bf16.mxu0 %v711
    %1005 = vmatpush1.bf16.msra.mxu0 %v710
    %1006 = vmatprep.subr.bf16.mxu0 %v713
    %1007 = vmatpush1.bf16.msra.mxu0 %v712
    %1008 = vmatprep.subr.bf16.mxu0 %v715
    %1009 = vmatpush1.bf16.msra.mxu0 %v714
    %1010 = vmatprep.subr.bf16.mxu0 %v717
    %1011 = vmatpush1.bf16.msra.mxu0 %v716
    %1012 = vmatprep.subr.bf16.mxu0 %v719
    %1013 = vmatpush1.bf16.msra.mxu0 %v718
    %1014 = vmatprep.subr.bf16.mxu0 %v721
    %1015 = vmatpush1.bf16.msra.mxu0 %v720
    %1016 = vmatprep.subr.bf16.mxu0 %v723
    %1017 = vmatpush1.bf16.msra.mxu0 %v722
    %1018 = vmatprep.subr.bf16.mxu0 %v725
    %1019 = vmatpush1.bf16.msra.mxu0 %v724
    %1020 = vmatprep.mubr.bf16.mxu0 %v84
    %1021 = vmatmul.mubr.bf16.gmra.mrb[0].mxu0 %v83
    %v1022 = vpop.f32.mrb[0].mxu0
    %v1023 = vadd.f32 %v982, %v1022
    %v1024 = vpop.f32.mrb[0].mxu0
    %v1025 = vadd.f32 %v984, %v1024
    %v1026 = vpop.f32.mrb[0].mxu0
    %v1027 = vpop.f32.mrb[0].mxu0
    %1028 = vdwg.mxu0
    %v1029 = vmax.f32 %v1023, 0.0
    %v1030 = vmax.f32 %v1025, 0.0
    %v1031 = vld [vmem:[%s3] sm:$0xff]
    %v1032 = vld [vmem:[%s3 + $0x8] sm:$0xff]
    %v1033 = vld [vmem:[%s3 + $0x10] sm:$0xff]
    %v1034 = vld [vmem:[%s3 + $0x18] sm:$0xff]
    %v1035 = vld [vmem:[%s3 + $0x20] sm:$0xff]
    %v1036 = vld [vmem:[%s3 + $0x28] sm:$0xff]
    %v1037 = vld [vmem:[%s3 + $0x30] sm:$0xff]
    %v1038 = vld [vmem:[%s3 + $0x38] sm:$0xff]
    %v1039 = vld [vmem:[%s3 + $0x40] sm:$0xff]
    %v1040 = vld [vmem:[%s3 + $0x48] sm:$0xff]
    %v1041 = vld [vmem:[%s3 + $0x50] sm:$0xff]
    %v1042 = vld [vmem:[%s3 + $0x58] sm:$0xff]
    %v1043 = vld [vmem:[%s3 + $0x60] sm:$0xff]
    %v1044 = vld [vmem:[%s3 + $0x68] sm:$0xff]
    %v1045 = vld [vmem:[%s3 + $0x70] sm:$0xff]
    %v1046 = vld [vmem:[%s3 + $0x78] sm:$0xff]
    %v1047 = vld [vmem:[%s3 + $0x80] sm:$0xff]
    %v1048 = vld [vmem:[%s3 + $0x88] sm:$0xff]
    %v1049 = vld [vmem:[%s3 + $0x90] sm:$0xff]
    %v1050 = vld [vmem:[%s3 + $0x98] sm:$0xff]
    %v1051 = vld [vmem:[%s3 + $0xa0] sm:$0xff]
    %v1052 = vld [vmem:[%s3 + $0xa8] sm:$0xff]
    %v1053 = vld [vmem:[%s3 + $0xb0] sm:$0xff]
    %v1054 = vld [vmem:[%s3 + $0xb8] sm:$0xff]
    %v1055 = vld [vmem:[%s3 + $0xc0] sm:$0xff]
    %v1056 = vld [vmem:[%s3 + $0xc8] sm:$0xff]
    %v1057 = vld [vmem:[%s3 + $0xd0] sm:$0xff]
    %v1058 = vld [vmem:[%s3 + $0xd8] sm:$0xff]
    %v1059 = vld [vmem:[%s3 + $0xe0] sm:$0xff]
    %v1060 = vld [vmem:[%s3 + $0xe8] sm:$0xff]
    %v1061 = vld [vmem:[%s3 + $0xf0] sm:$0xff]
    %v1062 = vld [vmem:[%s3 + $0xf8] sm:$0xff]
    %v1063 = vld [vmem:[%s4] sm:$0x1]
    %1064 = vmatprep.subr.mxu0 0.0
    %1065 = vmatpush1.msra.mxu0 %v1031
    %1066 = vmatprep.subr.mxu0 0.0
    %1067 = vmatpush1.msra.mxu0 %v1032
    %1068 = vmatprep.subr.mxu0 0.0
    %1069 = vmatpush1.msra.mxu0 %v1033
    %1070 = vmatprep.subr.mxu0 0.0
    %1071 = vmatpush1.msra.mxu0 %v1034
    %1072 = vmatprep.subr.mxu0 0.0
    %1073 = vmatpush1.msra.mxu0 %v1035
    %1074 = vmatprep.subr.mxu0 0.0
    %1075 = vmatpush1.msra.mxu0 %v1036
    %1076 = vmatprep.subr.mxu0 0.0
    %1077 = vmatpush1.msra.mxu0 %v1037
    %1078 = vmatprep.subr.mxu0 0.0
    %1079 = vmatpush1.msra.mxu0 %v1038
    %1080 = vmatprep.subr.mxu0 0.0
    %1081 = vmatpush1.msra.mxu0 %v1039
    %1082 = vmatprep.subr.mxu0 0.0
    %1083 = vmatpush1.msra.mxu0 %v1040
    %1084 = vmatprep.subr.mxu0 0.0
    %1085 = vmatpush1.msra.mxu0 %v1041
    %1086 = vmatprep.subr.mxu0 0.0
    %1087 = vmatpush1.msra.mxu0 %v1042
    %1088 = vmatprep.subr.mxu0 0.0
    %1089 = vmatpush1.msra.mxu0 %v1043
    %1090 = vmatprep.subr.mxu0 0.0
    %1091 = vmatpush1.msra.mxu0 %v1044
    %1092 = vmatprep.subr.mxu0 0.0
    %1093 = vmatpush1.msra.mxu0 %v1045
    %1094 = vmatprep.subr.mxu0 0.0
    %1095 = vmatpush1.msra.mxu0 %v1046
    %1096 = vmatprep.subr.mxu0 0.0
    %1097 = vmatpush1.msra.mxu0 %v1047
    %1098 = vmatprep.subr.mxu0 0.0
    %1099 = vmatpush1.msra.mxu0 %v1048
    %1100 = vmatprep.subr.mxu0 0.0
    %1101 = vmatpush1.msra.mxu0 %v1049
    %1102 = vmatprep.subr.mxu0 0.0
    %1103 = vmatpush1.msra.mxu0 %v1050
    %1104 = vmatprep.subr.mxu0 0.0
    %1105 = vmatpush1.msra.mxu0 %v1051
    %1106 = vmatprep.subr.mxu0 0.0
    %1107 = vmatpush1.msra.mxu0 %v1052
    %1108 = vmatprep.subr.mxu0 0.0
    %1109 = vmatpush1.msra.mxu0 %v1053
    %1110 = vmatprep.subr.mxu0 0.0
    %1111 = vmatpush1.msra.mxu0 %v1054
    %1112 = vmatprep.subr.mxu0 0.0
    %1113 = vmatpush1.msra.mxu0 %v1055
    %1114 = vmatprep.subr.mxu0 0.0
    %1115 = vmatpush1.msra.mxu0 %v1056
    %1116 = vmatprep.subr.mxu0 0.0
    %1117 = vmatpush1.msra.mxu0 %v1057
    %1118 = vmatprep.subr.mxu0 0.0
    %1119 = vmatpush1.msra.mxu0 %v1058
    %1120 = vmatprep.subr.mxu0 0.0
    %1121 = vmatpush1.msra.mxu0 %v1059
    %1122 = vmatprep.subr.mxu0 0.0
    %1123 = vmatpush1.msra.mxu0 %v1060
    %1124 = vmatprep.subr.mxu0 0.0
    %1125 = vmatpush1.msra.mxu0 %v1061
    %1126 = vmatprep.subr.mxu0 0.0
    %1127 = vmatpush1.msra.mxu0 %v1062
    %1128 = vmatprep.mubr.f32.mxu0 %v1030
    %1129 = vmatmul.mubr.f32.gmra.mrb[0].mxu0 %v1029
    %v1130 = vpop.f32.mrb[0].mxu0
    %v1131 = vadd.f32 %v1063, %v1130
    %v1132 = vpop.f32.mrb[0].mxu0
    %1133 = vdwg.mxu0
    %v1134 = vxor.u32 %v1131, 2147483648
    %v1135 = vmul.f32 %v1134, 1.442695
    %v1136 = vpow.pop %v1135
    %v1137 = vadd.f32 %v1136, 1.0
    %v1138 = vrcp.pop %v1137
    %v1139 = vmul.f32 1.0, %v1138
    %vm1140 = vcmask 40960
    %1141 = vst.msk [vmem:[#allocation5] sm:$0x1] %vm1140, %v1139
    // Predicated region
    $region26: #{tpu_custom_call.1} parent=1 // pred_check
      _
    $region27: #{tpu_custom_call.1} parent=1 // pred_check_branch
      %1143 = sbr.rel (0) target = $region29
    $region28: #{tpu_custom_call.1} parent=1 // pred_region
      %s1145 = ssub.s32 16, 16
      %1146 = vsyncadd [#allocation4], %s1145
      %s1148 = sshll.u32 [#allocation5], 4
      %s1149 = int_to_ptr.vmem [resolvable:$true] %s1148
      %1151 = dma.vmem_to_hbm [thread:$0]  %s1149, 16, %s5, [#allocation4]
    $region29: #{tpu_custom_call.1} parent=1 // pred_fallthru
      _
    // Predicated region
    $region30: #{tpu_custom_call.1} parent=1 // pred_check
      _
    $region31: #{tpu_custom_call.1} parent=1 // pred_check_branch
      %1153 = sbr.rel (0) target = $region33
    $region32: #{tpu_custom_call.1} parent=1 // pred_region
      %1154 = dma.done [#allocation4], 16
    $region33: #{tpu_custom_call.1} parent=1 // pred_fallthru
      _
    %1155 = vsyncpa [#allocation3], 1
    %1156 = vsyncpa [#allocation4], 1

</llo_original>
